<compile_context>
chip_gen: v5e
topology: v5e:2x2
jax: 0.10.0
libtpu: 0.0.40
codegen_flags: <defaults>
</compile_context>

<pallas_src>
import jax
import jax.numpy as jnp
from jax.experimental import pallas as pl
from jax.experimental.pallas import tpu as pltpu

IN_FEATURES = 6
OUT_FEATURES = 1


def _rup(n, m):
    return -(-n // m) * m


# Sublane-padded feature sizes (feature axes on sublanes, batch on lanes).
IN_P = _rup(IN_FEATURES + 1, 8)     # 8   padded input rows (incl. the ones row)
HID_P = _rup(2 * IN_FEATURES, 8)    # 16  padded hidden (2*in) rows
Z_P = _rup(2 * OUT_FEATURES, 8)     # 8   padded mid (2*out) rows
OUT_P = _rup(OUT_FEATURES, 8)       # 8   rows used inside the W3 dot (store trims)

# Padded slots used to fold the biases into the matmuls.
_ONES_ROW = IN_FEATURES             # input row holding constant 1.0 (carries b1)
_B2_ROW = 2 * IN_FEATURES           # padded h row (h == 0 -> cos == 1) for b2
_B3_ROW = 2 * OUT_FEATURES          # padded z row (== 0.5 exactly) for b3
assert _ONES_ROW < IN_P and _B2_ROW < HID_P and _B3_ROW < Z_P

# 3-term Cody-Waite split of pi/2 (leading terms have short mantissas so
# k * term is exact for |k| up to ~1e4).
_TWO_OVER_PI = 0.6366197723675814
_PIO2_1 = 1.5703125
_PIO2_2 = 4.837512969970703e-04
_PIO2_3 = 7.549789948768648e-08


def _sincos(h):
    """sin(h), cos(h) with a single shared range reduction.

    Accurate to ~1e-7 abs for |h| up to ~1e4.  sin(0) == 0 and cos(0) == 1
    exactly (the b2 padding fold relies on cos(0) == 1).
    """
    k = jnp.floor(h * _TWO_OVER_PI + 0.5)          # nearest multiple of pi/2
    r = h - k * _PIO2_1
    r = r - k * _PIO2_2
    r = r - k * _PIO2_3                            # |r| <= pi/4
    r2 = r * r
    sin_r = r + r * r2 * (-1.0 / 6.0 + r2 * (1.0 / 120.0
                          + r2 * (-1.0 / 5040.0 + r2 * (1.0 / 362880.0))))
    cos_r = 1.0 + r2 * (-0.5 + r2 * (1.0 / 24.0
                        + r2 * (-1.0 / 720.0 + r2 * (1.0 / 40320.0))))
    ki = k.astype(jnp.int32)
    swap = (ki & 1) == 1
    sin_sign = jnp.where((ki & 2) == 0, 1.0, -1.0)
    cos_sign = jnp.where(((ki + 1) & 2) == 0, 1.0, -1.0)
    sin_h = sin_sign * jnp.where(swap, cos_r, sin_r)
    cos_h = cos_sign * jnp.where(swap, sin_r, cos_r)
    return sin_h, cos_h


def _sigmoid(x):
    # Keeps the transcendental on the EUP (tanh) with only two VALU ops.
    # sigmoid(0) == 0.5 exactly, which the folded-b3 padding invariant needs.
    return 0.5 * jnp.tanh(0.5 * x) + 0.5


def _motion_embedding_kernel(xT_ref, w1_ref, w2h_ref, w2q_ref, w2s_ref,
                             w2c_ref, w3_ref, o_ref):
    # xT_ref : (IN_P, TM)    [x; 1; 0]^T tile (row _ONES_ROW is 1.0)
    # w1_ref : (HID_P, IN_P) W1 with b1 folded into column _ONES_ROW
    # w2*_ref: (Z_P, HID_P)  W2 split into its h / h^2 / sin / cos bands
    #                        (b2 folded into w2c column _B2_ROW)
    # w3_ref : (OUT_P, Z_P)  W3 with 2*b3 folded into column _B3_ROW
    # o_ref  : (OUT_FEATURES, TM)  un-padded out^T tile
    xT = xT_ref[...]

    # h^T = W1 @ [x; 1]^T   (b1 via the ones row; padded h rows stay exactly 0)
    h = jnp.dot(w1_ref[...], xT, preferred_element_type=jnp.float32)

    sin_h, cos_h = _sincos(h)

    # z^T = sigmoid(W2_h@h + W2_q@h^2 + W2_s@sin h + W2_c@cos h)
    # Banded form: never materializes the (4*HID_P, TM) concat buffer.
    acc = jnp.dot(w2h_ref[...], h, preferred_element_type=jnp.float32)
    acc = acc + jnp.dot(w2q_ref[...], h * h, preferred_element_type=jnp.float32)
    acc = acc + jnp.dot(w2s_ref[...], sin_h, preferred_element_type=jnp.float32)
    acc = acc + jnp.dot(w2c_ref[...], cos_h, preferred_element_type=jnp.float32)
    z = _sigmoid(acc)

    # out^T = sigmoid(W3 @ z^T)   (b3 rides on the padded z row == 0.5);
    # only the real output row is stored (lane-dense, un-padded).
    pre = jnp.dot(w3_ref[...], z, preferred_element_type=jnp.float32)
    o_ref[...] = _sigmoid(pre[:OUT_FEATURES, :])


def _prep_params(params):
    w1, b1, w2, b2, w3, b3 = [jnp.asarray(p, jnp.float32) for p in params]
    two_in = 2 * IN_FEATURES
    two_out = 2 * OUT_FEATURES

    # W1 padded, with b1 folded into the ones column; padded rows stay 0.
    w1_p = (jnp.zeros((HID_P, IN_P), jnp.float32)
            .at[:two_in, :IN_FEATURES].set(w1)
            .at[:two_in, _ONES_ROW].set(b1))

    # W2 split into its four concat bands, each (Z_P, HID_P) with zero padding.
    def band(g):
        return (jnp.zeros((Z_P, HID_P), jnp.float32)
                .at[:two_out, :two_in].set(w2[:, g * two_in:(g + 1) * two_in]))
    w2_h, w2_q, w2_s = band(0), band(1), band(2)
    # b2 rides in the cos band on a padded h row (h row _B2_ROW is exactly 0,
    # so cos() of it is exactly 1.0 for every lane).
    w2_c = band(3).at[:two_out, _B2_ROW].set(b2)

    # W3 padded; 2*b3 rides on a padded z row (that row is exactly 0.5).
    w3_p = (jnp.zeros((OUT_P, Z_P), jnp.float32)
            .at[:OUT_FEATURES, :two_out].set(w3)
            .at[:OUT_FEATURES, _B3_ROW].set(2.0 * b3))
    return w1_p, w2_h, w2_q, w2_s, w2_c, w3_p


def motion_embedding_encoder_feature_major(xT, params, *, tile_m=8192):
    """Feature-major entry: xT (in_features, B) -> (out_features, B).

    Preferred for large B: avoids the (B, in) -> (in, B) relayout, which is
    otherwise a separate XLA op that re-reads the whole batch.
    """
    xT = jnp.asarray(xT, jnp.float32)
    assert xT.shape[0] == IN_FEATURES
    B = xT.shape[1]

    Bp128 = _rup(B, 128)
    # Batch tile (lane axis): multiple of 128, capped so that (a) the grid has
    # >= 2 steps whenever B allows it (v7x shards the "parallel" axis over its
    # 2 TensorCores) and (b) double-buffered I/O tiles + Mosaic elementwise
    # temporaries stay well inside VMEM on v5e/v6e (128 MiB) and v7x (64 MiB).
    TM = max(128, min(_rup(tile_m, 128), _rup(-(-Bp128 // 2), 128)))
    Bp = _rup(B, TM)

    # Pad rows to IN_P and lanes to Bp; row _ONES_ROW carries the folded b1.
    # TODO(synk): for very large B the producer should emit this feature-major
    # layout directly so no relayout of the batch axis is ever needed.
    xT_p = (jnp.zeros((IN_P, Bp), jnp.float32)
            .at[:IN_FEATURES, :B].set(xT)
            .at[_ONES_ROW, :].set(1.0))

    w1_p, w2_h, w2_q, w2_s, w2_c, w3_p = _prep_params(params)

    def const_spec(shape):
        # Weights: same block every grid step -> stay VMEM-resident.
        return pl.BlockSpec(shape, lambda i: (0, 0))

    flops = 2 * Bp * (HID_P * IN_P + 4 * Z_P * HID_P + OUT_P * Z_P)
    transcendentals = (Z_P + OUT_FEATURES) * Bp
    bytes_accessed = 4 * ((IN_P + OUT_FEATURES) * Bp
                          + HID_P * IN_P + 4 * Z_P * HID_P + OUT_P * Z_P)

    out_t = pl.pallas_call(
        _motion_embedding_kernel,
        out_shape=jax.ShapeDtypeStruct((OUT_FEATURES, Bp), jnp.float32),
        grid_spec=pltpu.PrefetchScalarGridSpec(
            num_scalar_prefetch=0,
            grid=(Bp // TM,),
            in_specs=[
                pl.BlockSpec((IN_P, TM), lambda i: (0, i)),   # x^T tile
                const_spec((HID_P, IN_P)),                    # W1 (+b1 column)
                const_spec((Z_P, HID_P)),                     # W2 band: h
                const_spec((Z_P, HID_P)),                     # W2 band: h^2
                const_spec((Z_P, HID_P)),                     # W2 band: sin h
                const_spec((Z_P, HID_P)),                     # W2 band: cos h (+b2)
                const_spec((OUT_P, Z_P)),                     # W3 (+2*b3 column)
            ],
            out_specs=pl.BlockSpec((OUT_FEATURES, TM), lambda i: (0, i)),
        ),
        compiler_params=pltpu.CompilerParams(
            dimension_semantics=("parallel",),                # v7x: 2 TCs share grid
            vmem_limit_bytes=48 * 1024 * 1024),
        cost_estimate=pl.CostEstimate(
            flops=int(flops),
            transcendentals=int(transcendentals),
            bytes_accessed=int(bytes_accessed)),
    )(xT_p, w1_p, w2_h, w2_q, w2_s, w2_c, w3_p)

    return out_t[:, :B]


def motion_embedding_encoder(x, params, *, tile_m=8192):
    """x: (B, in_features) float32 -> (B, out_features) float32."""
    x = jnp.asarray(x, jnp.float32)
    out_t = motion_embedding_encoder_feature_major(x.T, params, tile_m=tile_m)
    return out_t.T


def init_params(key):
    """Deterministic parameter init matching the nn.Module shapes."""
    k1, k2, k3, k4, k5, k6 = jax.random.split(key, 6)
    inf, outf = IN_FEATURES, OUT_FEATURES
    w1 = jax.random.uniform(k1, (2 * inf, inf), jnp.float32, -0.4, 0.4)
    b1 = jax.random.uniform(k2, (2 * inf,), jnp.float32, -0.4, 0.4)
    w2 = jax.random.uniform(k3, (2 * outf, 8 * inf), jnp.float32, -0.15, 0.15)
    b2 = jax.random.uniform(k4, (2 * outf,), jnp.float32, -0.15, 0.15)
    w3 = jax.random.uniform(k5, (outf, 2 * outf), jnp.float32, -0.7, 0.7)
    b3 = jax.random.uniform(k6, (outf,), jnp.float32, -0.7, 0.7)
    return (w1, b1, w2, b2, w3, b3)


def reference(x, params):
    """Pure-JAX reference mirroring the PyTorch forward exactly."""
    w1, b1, w2, b2, w3, b3 = params
    h = x @ w1.T + b1
    f = jnp.concatenate([h, h ** 2, jnp.sin(h), jnp.cos(h)], axis=-1)
    z = jax.nn.sigmoid(f @ w2.T + b2)
    return jax.nn.sigmoid(z @ w3.T + b3)


if __name__ == "__main__":
    key = jax.random.PRNGKey(0)
    kx, kx2, kx3, kp = jax.random.split(key, 4)
    params = init_params(kp)

    # Small single-tile case.
    B = 8
    x = jax.random.normal(kx, (B, IN_FEATURES), jnp.float32)
    out = jax.block_until_ready(motion_embedding_encoder(x, params))
    ref = reference(x, params)
    assert out.shape == (B, OUT_FEATURES)
    assert jnp.allclose(out, ref, atol=1e-5, rtol=1e-5), (out, ref)

    # Multi-tile grid path with an explicit small tile (pipelining + padding).
    B2 = 300
    x2 = jax.random.normal(kx2, (B2, IN_FEATURES), jnp.float32)
    out2 = jax.block_until_ready(
        motion_embedding_encoder(x2, params, tile_m=128))
    ref2 = reference(x2, params)
    assert out2.shape == (B2, OUT_FEATURES)
    assert jnp.allclose(out2, ref2, atol=1e-5, rtol=1e-5)

    # Larger batch exercising the default (large) tile, >=2 grid steps and a
    # wider sin/cos argument range.
    B3 = 33000
    x3 = 4.0 * jax.random.normal(kx3, (B3, IN_FEATURES), jnp.float32)
    out3 = jax.block_until_ready(motion_embedding_encoder(x3, params))
    ref3 = reference(x3, params)
    assert out3.shape == (B3, OUT_FEATURES)
    assert jnp.allclose(out3, ref3, atol=1e-5, rtol=1e-5)

    print("KERNEL_OK")
</pallas_src>

<mosaic_0001>
module attributes {stable_mosaic.version = 11 : i64} {
  func.func @_motion_embedding_kernel(%arg0: i32, %arg1: memref<8x128xf32, #tpu.memory_space<vmem>>, %arg2: memref<16x8xf32, #tpu.memory_space<vmem>>, %arg3: memref<8x16xf32, #tpu.memory_space<vmem>>, %arg4: memref<8x16xf32, #tpu.memory_space<vmem>>, %arg5: memref<8x16xf32, #tpu.memory_space<vmem>>, %arg6: memref<8x16xf32, #tpu.memory_space<vmem>>, %arg7: memref<8x8xf32, #tpu.memory_space<vmem>>, %arg8: memref<1x128xf32, #tpu.memory_space<vmem>>) attributes {dimension_semantics = [#tpu.dimension_semantics<parallel>], iteration_bounds = array<i64: 1>, scalar_prefetch = 0 : i64, scratch_operands = 0 : i64, tpu.core_type = #tpu.core_type<tc>, window_params = [{transform_indices = @transform_0, window_bounds = array<i64: 8, 128>}, {pipeline_mode = #tpu.pipeline_mode<synchronous>, transform_indices = @transform_1, window_bounds = array<i64: 16, 8>}, {pipeline_mode = #tpu.pipeline_mode<synchronous>, transform_indices = @transform_2, window_bounds = array<i64: 8, 16>}, {pipeline_mode = #tpu.pipeline_mode<synchronous>, transform_indices = @transform_3, window_bounds = array<i64: 8, 16>}, {pipeline_mode = #tpu.pipeline_mode<synchronous>, transform_indices = @transform_4, window_bounds = array<i64: 8, 16>}, {pipeline_mode = #tpu.pipeline_mode<synchronous>, transform_indices = @transform_5, window_bounds = array<i64: 8, 16>}, {pipeline_mode = #tpu.pipeline_mode<synchronous>, transform_indices = @transform_6, window_bounds = array<i64: 8, 8>}, {transform_indices = @transform_7, window_bounds = array<i64: 1, 128>}]} {
    %c0 = arith.constant 0 : index
    %c0_0 = arith.constant 0 : index
    %0 = vector.load %arg1[%c0, %c0_0] : memref<8x128xf32, #tpu.memory_space<vmem>>, vector<8x128xf32>
    %c0_1 = arith.constant 0 : index
    %c0_2 = arith.constant 0 : index
    %1 = vector.load %arg2[%c0_1, %c0_2] : memref<16x8xf32, #tpu.memory_space<vmem>>, vector<16x8xf32>
    %cst = arith.constant dense<0.000000e+00> : vector<16x128xf32>
    %2 = tpu.matmul %1, %0, %cst {dimension_numbers = #tpu.dot_dimension_numbers<[1], [0], [0], [1], [0, 0, 1, 1], [], []>} : vector<16x8xf32>, vector<8x128xf32>, vector<16x128xf32> -> vector<16x128xf32>
    %cst_3 = arith.constant 0.636619746 : f32
    %3 = vector.broadcast %cst_3 : f32 to vector<16x128xf32>
    %4 = arith.mulf %2, %3 : vector<16x128xf32>
    %cst_4 = arith.constant 5.000000e-01 : f32
    %5 = vector.broadcast %cst_4 : f32 to vector<16x128xf32>
    %6 = arith.addf %4, %5 : vector<16x128xf32>
    %7 = math.floor %6 : vector<16x128xf32>
    %cst_5 = arith.constant 1.5703125 : f32
    %8 = vector.broadcast %cst_5 : f32 to vector<16x128xf32>
    %9 = arith.mulf %7, %8 : vector<16x128xf32>
    %10 = arith.subf %2, %9 : vector<16x128xf32>
    %cst_6 = arith.constant 4.83751297E-4 : f32
    %11 = vector.broadcast %cst_6 : f32 to vector<16x128xf32>
    %12 = arith.mulf %7, %11 : vector<16x128xf32>
    %13 = arith.subf %10, %12 : vector<16x128xf32>
    %cst_7 = arith.constant 7.549790e-08 : f32
    %14 = vector.broadcast %cst_7 : f32 to vector<16x128xf32>
    %15 = arith.mulf %7, %14 : vector<16x128xf32>
    %16 = arith.subf %13, %15 : vector<16x128xf32>
    %17 = arith.mulf %16, %16 : vector<16x128xf32>
    %18 = arith.mulf %16, %17 : vector<16x128xf32>
    %cst_8 = arith.constant 2.75573188E-6 : f32
    %19 = vector.broadcast %cst_8 : f32 to vector<16x128xf32>
    %20 = arith.mulf %17, %19 : vector<16x128xf32>
    %cst_9 = arith.constant -1.98412701E-4 : f32
    %21 = vector.broadcast %cst_9 : f32 to vector<16x128xf32>
    %22 = arith.addf %21, %20 : vector<16x128xf32>
    %23 = arith.mulf %17, %22 : vector<16x128xf32>
    %cst_10 = arith.constant 0.00833333377 : f32
    %24 = vector.broadcast %cst_10 : f32 to vector<16x128xf32>
    %25 = arith.addf %24, %23 : vector<16x128xf32>
    %26 = arith.mulf %17, %25 : vector<16x128xf32>
    %cst_11 = arith.constant -0.166666672 : f32
    %27 = vector.broadcast %cst_11 : f32 to vector<16x128xf32>
    %28 = arith.addf %27, %26 : vector<16x128xf32>
    %29 = arith.mulf %18, %28 : vector<16x128xf32>
    %30 = arith.addf %16, %29 : vector<16x128xf32>
    %cst_12 = arith.constant 2.48015876E-5 : f32
    %31 = vector.broadcast %cst_12 : f32 to vector<16x128xf32>
    %32 = arith.mulf %17, %31 : vector<16x128xf32>
    %cst_13 = arith.constant -0.00138888892 : f32
    %33 = vector.broadcast %cst_13 : f32 to vector<16x128xf32>
    %34 = arith.addf %33, %32 : vector<16x128xf32>
    %35 = arith.mulf %17, %34 : vector<16x128xf32>
    %cst_14 = arith.constant 0.0416666679 : f32
    %36 = vector.broadcast %cst_14 : f32 to vector<16x128xf32>
    %37 = arith.addf %36, %35 : vector<16x128xf32>
    %38 = arith.mulf %17, %37 : vector<16x128xf32>
    %cst_15 = arith.constant -5.000000e-01 : f32
    %39 = vector.broadcast %cst_15 : f32 to vector<16x128xf32>
    %40 = arith.addf %39, %38 : vector<16x128xf32>
    %41 = arith.mulf %17, %40 : vector<16x128xf32>
    %cst_16 = arith.constant 1.000000e+00 : f32
    %42 = vector.broadcast %cst_16 : f32 to vector<16x128xf32>
    %43 = arith.addf %42, %41 : vector<16x128xf32>
    %44 = arith.fptosi %7 : vector<16x128xf32> to vector<16x128xi32>
    %c1_i32 = arith.constant 1 : i32
    %45 = vector.broadcast %c1_i32 : i32 to vector<16x128xi32>
    %46 = arith.andi %44, %45 : vector<16x128xi32>
    %c1_i32_17 = arith.constant 1 : i32
    %47 = vector.broadcast %c1_i32_17 : i32 to vector<16x128xi32>
    %48 = arith.cmpi eq, %46, %47 : vector<16x128xi32>
    %c2_i32 = arith.constant 2 : i32
    %49 = vector.broadcast %c2_i32 : i32 to vector<16x128xi32>
    %50 = arith.andi %44, %49 : vector<16x128xi32>
    %c0_i32 = arith.constant 0 : i32
    %51 = vector.broadcast %c0_i32 : i32 to vector<16x128xi32>
    %52 = arith.cmpi eq, %50, %51 : vector<16x128xi32>
    %cst_18 = arith.constant 1.000000e+00 : f32
    %cst_19 = arith.constant -1.000000e+00 : f32
    %53 = vector.broadcast %cst_18 : f32 to vector<16x128xf32>
    %54 = vector.broadcast %cst_19 : f32 to vector<16x128xf32>
    %55 = arith.select %52, %53, %54 : vector<16x128xi1>, vector<16x128xf32>
    %c1_i32_20 = arith.constant 1 : i32
    %56 = vector.broadcast %c1_i32_20 : i32 to vector<16x128xi32>
    %57 = arith.addi %44, %56 : vector<16x128xi32>
    %c2_i32_21 = arith.constant 2 : i32
    %58 = vector.broadcast %c2_i32_21 : i32 to vector<16x128xi32>
    %59 = arith.andi %57, %58 : vector<16x128xi32>
    %c0_i32_22 = arith.constant 0 : i32
    %60 = vector.broadcast %c0_i32_22 : i32 to vector<16x128xi32>
    %61 = arith.cmpi eq, %59, %60 : vector<16x128xi32>
    %cst_23 = arith.constant 1.000000e+00 : f32
    %cst_24 = arith.constant -1.000000e+00 : f32
    %62 = vector.broadcast %cst_23 : f32 to vector<16x128xf32>
    %63 = vector.broadcast %cst_24 : f32 to vector<16x128xf32>
    %64 = arith.select %61, %62, %63 : vector<16x128xi1>, vector<16x128xf32>
    %65 = arith.select %48, %43, %30 : vector<16x128xi1>, vector<16x128xf32>
    %66 = arith.mulf %55, %65 : vector<16x128xf32>
    %67 = arith.select %48, %30, %43 : vector<16x128xi1>, vector<16x128xf32>
    %68 = arith.mulf %64, %67 : vector<16x128xf32>
    %c0_25 = arith.constant 0 : index
    %c0_26 = arith.constant 0 : index
    %69 = vector.load %arg3[%c0_25, %c0_26] : memref<8x16xf32, #tpu.memory_space<vmem>>, vector<8x16xf32>
    %cst_27 = arith.constant dense<0.000000e+00> : vector<8x128xf32>
    %70 = tpu.matmul %69, %2, %cst_27 {dimension_numbers = #tpu.dot_dimension_numbers<[1], [0], [0], [1], [0, 0, 1, 1], [], []>} : vector<8x16xf32>, vector<16x128xf32>, vector<8x128xf32> -> vector<8x128xf32>
    %c0_28 = arith.constant 0 : index
    %c0_29 = arith.constant 0 : index
    %71 = vector.load %arg4[%c0_28, %c0_29] : memref<8x16xf32, #tpu.memory_space<vmem>>, vector<8x16xf32>
    %72 = arith.mulf %2, %2 : vector<16x128xf32>
    %cst_30 = arith.constant dense<0.000000e+00> : vector<8x128xf32>
    %73 = tpu.matmul %71, %72, %cst_30 {dimension_numbers = #tpu.dot_dimension_numbers<[1], [0], [0], [1], [0, 0, 1, 1], [], []>} : vector<8x16xf32>, vector<16x128xf32>, vector<8x128xf32> -> vector<8x128xf32>
    %74 = arith.addf %70, %73 : vector<8x128xf32>
    %c0_31 = arith.constant 0 : index
    %c0_32 = arith.constant 0 : index
    %75 = vector.load %arg5[%c0_31, %c0_32] : memref<8x16xf32, #tpu.memory_space<vmem>>, vector<8x16xf32>
    %cst_33 = arith.constant dense<0.000000e+00> : vector<8x128xf32>
    %76 = tpu.matmul %75, %66, %cst_33 {dimension_numbers = #tpu.dot_dimension_numbers<[1], [0], [0], [1], [0, 0, 1, 1], [], []>} : vector<8x16xf32>, vector<16x128xf32>, vector<8x128xf32> -> vector<8x128xf32>
    %77 = arith.addf %74, %76 : vector<8x128xf32>
    %c0_34 = arith.constant 0 : index
    %c0_35 = arith.constant 0 : index
    %78 = vector.load %arg6[%c0_34, %c0_35] : memref<8x16xf32, #tpu.memory_space<vmem>>, vector<8x16xf32>
    %cst_36 = arith.constant dense<0.000000e+00> : vector<8x128xf32>
    %79 = tpu.matmul %78, %68, %cst_36 {dimension_numbers = #tpu.dot_dimension_numbers<[1], [0], [0], [1], [0, 0, 1, 1], [], []>} : vector<8x16xf32>, vector<16x128xf32>, vector<8x128xf32> -> vector<8x128xf32>
    %80 = arith.addf %77, %79 : vector<8x128xf32>
    %cst_37 = arith.constant 5.000000e-01 : f32
    %81 = vector.broadcast %cst_37 : f32 to vector<8x128xf32>
    %82 = arith.mulf %81, %80 : vector<8x128xf32>
    %83 = math.tanh %82 : vector<8x128xf32>
    %cst_38 = arith.constant 5.000000e-01 : f32
    %84 = vector.broadcast %cst_38 : f32 to vector<8x128xf32>
    %85 = arith.mulf %84, %83 : vector<8x128xf32>
    %cst_39 = arith.constant 5.000000e-01 : f32
    %86 = vector.broadcast %cst_39 : f32 to vector<8x128xf32>
    %87 = arith.addf %85, %86 : vector<8x128xf32>
    %c0_40 = arith.constant 0 : index
    %c0_41 = arith.constant 0 : index
    %88 = vector.load %arg7[%c0_40, %c0_41] : memref<8x8xf32, #tpu.memory_space<vmem>>, vector<8x8xf32>
    %cst_42 = arith.constant dense<0.000000e+00> : vector<8x128xf32>
    %89 = tpu.matmul %88, %87, %cst_42 {dimension_numbers = #tpu.dot_dimension_numbers<[1], [0], [0], [1], [0, 0, 1, 1], [], []>} : vector<8x8xf32>, vector<8x128xf32>, vector<8x128xf32> -> vector<8x128xf32>
    %90 = vector.extract_strided_slice %89 {offsets = [0, 0], sizes = [1, 128], strides = [1, 1]} : vector<8x128xf32> to vector<1x128xf32>
    %cst_43 = arith.constant 5.000000e-01 : f32
    %91 = vector.broadcast %cst_43 : f32 to vector<1x128xf32>
    %92 = arith.mulf %91, %90 : vector<1x128xf32>
    %93 = math.tanh %92 : vector<1x128xf32>
    %cst_44 = arith.constant 5.000000e-01 : f32
    %94 = vector.broadcast %cst_44 : f32 to vector<1x128xf32>
    %95 = arith.mulf %94, %93 : vector<1x128xf32>
    %cst_45 = arith.constant 5.000000e-01 : f32
    %96 = vector.broadcast %cst_45 : f32 to vector<1x128xf32>
    %97 = arith.addf %95, %96 : vector<1x128xf32>
    %c0_46 = arith.constant 0 : index
    %c0_47 = arith.constant 0 : index
    %98 = vector.load %arg8[%c0_46, %c0_47] : memref<1x128xf32, #tpu.memory_space<vmem>>, vector<1x128xf32>
    tpu.vector_store %arg8[%c0_46, %c0_47], %97 {strides = array<i32>} : memref<1x128xf32, #tpu.memory_space<vmem>>, vector<1x128xf32>,
    return
  }
  func.func @transform_0(%arg0: i32) -> (i32, i32) {
    %c0_i32 = arith.constant 0 : i32
    %c0_i32_0 = arith.constant 0 : i32
    return %c0_i32, %arg0 : i32, i32
  }
  func.func @transform_1(%arg0: i32) -> (i32, i32) {
    %c0_i32 = arith.constant 0 : i32
    %c0_i32_0 = arith.constant 0 : i32
    %c0_i32_1 = arith.constant 0 : i32
    return %c0_i32, %c0_i32_0 : i32, i32
  }
  func.func @transform_2(%arg0: i32) -> (i32, i32) {
    %c0_i32 = arith.constant 0 : i32
    %c0_i32_0 = arith.constant 0 : i32
    %c0_i32_1 = arith.constant 0 : i32
    return %c0_i32, %c0_i32_0 : i32, i32
  }
  func.func @transform_3(%arg0: i32) -> (i32, i32) {
    %c0_i32 = arith.constant 0 : i32
    %c0_i32_0 = arith.constant 0 : i32
    %c0_i32_1 = arith.constant 0 : i32
    return %c0_i32, %c0_i32_0 : i32, i32
  }
  func.func @transform_4(%arg0: i32) -> (i32, i32) {
    %c0_i32 = arith.constant 0 : i32
    %c0_i32_0 = arith.constant 0 : i32
    %c0_i32_1 = arith.constant 0 : i32
    return %c0_i32, %c0_i32_0 : i32, i32
  }
  func.func @transform_5(%arg0: i32) -> (i32, i32) {
    %c0_i32 = arith.constant 0 : i32
    %c0_i32_0 = arith.constant 0 : i32
    %c0_i32_1 = arith.constant 0 : i32
    return %c0_i32, %c0_i32_0 : i32, i32
  }
  func.func @transform_6(%arg0: i32) -> (i32, i32) {
    %c0_i32 = arith.constant 0 : i32
    %c0_i32_0 = arith.constant 0 : i32
    %c0_i32_1 = arith.constant 0 : i32
    return %c0_i32, %c0_i32_0 : i32, i32
  }
  func.func @transform_7(%arg0: i32) -> (i32, i32) {
    %c0_i32 = arith.constant 0 : i32
    %c0_i32_0 = arith.constant 0 : i32
    return %c0_i32, %arg0 : i32, i32
  }
}

</mosaic_0001>

<llo_original>
// kernel: tpu_custom_call.1
$region0: #{tpu_custom_call.1}
  #allocation0 [shape = 'u32[]', space=smem, size = 0x4, offset = 0x4, fixed_abs, tag = 'smem constant byte address 0x4 - core index']
  #allocation1 [shape = 'u32[72,128]{1,0:T(1,128)}', space=vmem, size = 0x9000, scoped, tag = 'internal scratch']
  %s0 = inlined_call_operand.vmem [shape: f32[8,128], index: 0, kind: input, shape index: {}]
  %s1 = inlined_call_operand.vmem [shape: f32[16,8], index: 1, kind: input, shape index: {}]
  %s2 = inlined_call_operand.vmem [shape: f32[8,16], index: 2, kind: input, shape index: {}]
  %s3 = inlined_call_operand.vmem [shape: f32[8,16], index: 3, kind: input, shape index: {}]
  %s4 = inlined_call_operand.hbm [shape: f32[8,16], index: 4, kind: input, shape index: {}]
  %s5 = inlined_call_operand.hbm [shape: f32[8,16], index: 5, kind: input, shape index: {}]
  %s6 = inlined_call_operand.hbm [shape: f32[8,8], index: 6, kind: input, shape index: {}]
  %s7 = inlined_call_operand.hbm [shape: f32[1,128], index: 7, kind: output, shape index: {}]
  %s8 = sld [smem:[#allocation0]]
  $region50: #{tpu_custom_call.1} parent=0
    _
  %s10 = ssub.s32 1, %s8
  %s11 = scalar_select 0, %s10, %s8
  $region1: #{tpu_custom_call.1} parent=0
    #allocation2 [shape = 'u8[4096]{0}', space=vmem, size = 0x1000, scoped, tag = 'input window, operand 4, single buffered']
    #allocation3 [shape = 's32[1]{0}', space=sflag, size = 0x4, scoped, tag = 'scoped memory for tpu_custom_call.1']
    #allocation4 [shape = 's32[1]{0}', space=sflag, size = 0x4, scoped, tag = 'scoped memory for tpu_custom_call.1']
    #allocation5 [shape = 'u8[4096]{0}', space=vmem, size = 0x1000, scoped, tag = 'input window, operand 5, single buffered']
    #allocation6 [shape = 's32[1]{0}', space=sflag, size = 0x4, scoped, tag = 'scoped memory for tpu_custom_call.1']
    #allocation7 [shape = 'u8[4096]{0}', space=vmem, size = 0x1000, scoped, tag = 'input window, operand 6, single buffered']
    #allocation8 [shape = 'u8[512]{0}', space=vmem, size = 0x400, scoped, tag = 'output window, operand 0, single buffered']
    %12 = vsyncpa [#allocation3], 0
    %13 = vsyncpa [#allocation6], 0
    %14 = vsyncpa [#allocation4], 0
    // Predicated region
    $region2: #{tpu_custom_call.1} parent=1 // pred_check
      _
    $region3: #{tpu_custom_call.1} parent=1 // pred_check_branch
      %16 = sbr.rel (0) target = $region5
    $region4: #{tpu_custom_call.1} parent=1 // pred_region
      _
    $region5: #{tpu_custom_call.1} parent=1 // pred_fallthru
      _
    // Predicated region
    $region6: #{tpu_custom_call.1} parent=1 // pred_check
      _
    $region7: #{tpu_custom_call.1} parent=1 // pred_check_branch
      %18 = sbr.rel (0) target = $region9
    $region8: #{tpu_custom_call.1} parent=1 // pred_region
      _
    $region9: #{tpu_custom_call.1} parent=1 // pred_fallthru
      _
    // Predicated region
    $region10: #{tpu_custom_call.1} parent=1 // pred_check
      _
    $region11: #{tpu_custom_call.1} parent=1 // pred_check_branch
      %20 = sbr.rel (0) target = $region13
    $region12: #{tpu_custom_call.1} parent=1 // pred_region
      _
    $region13: #{tpu_custom_call.1} parent=1 // pred_fallthru
      _
    // Predicated region
    $region14: #{tpu_custom_call.1} parent=1 // pred_check
      _
    $region15: #{tpu_custom_call.1} parent=1 // pred_check_branch
      %22 = sbr.rel (0) target = $region17
    $region16: #{tpu_custom_call.1} parent=1 // pred_region
      _
    $region17: #{tpu_custom_call.1} parent=1 // pred_fallthru
      _
    // Predicated region
    $region18: #{tpu_custom_call.1} parent=1 // pred_check
      _
    $region19: #{tpu_custom_call.1} parent=1 // pred_check_branch
      %24 = sbr.rel (0) target = $region21
    $region20: #{tpu_custom_call.1} parent=1 // pred_region
      %26 = vsyncadd [#allocation3], 0
      %s28 = sshll.u32 %s4, 4
      %s29 = int_to_ptr.hbm [resolvable:$true] %s28
      %s30 = sshll.u32 [#allocation2], 4
      %s31 = int_to_ptr.vmem [resolvable:$true] %s30
      %33 = dma.hbm_to_vmem [thread:$0]  %s29, 128, %s31, [#allocation3]
    $region21: #{tpu_custom_call.1} parent=1 // pred_fallthru
      _
    // Predicated region
    $region22: #{tpu_custom_call.1} parent=1 // pred_check
      _
    $region23: #{tpu_custom_call.1} parent=1 // pred_check_branch
      %35 = sbr.rel (0) target = $region25
    $region24: #{tpu_custom_call.1} parent=1 // pred_region
      %37 = vsyncadd [#allocation6], 0
      %s39 = sshll.u32 %s5, 4
      %s40 = int_to_ptr.hbm [resolvable:$true] %s39
      %s41 = sshll.u32 [#allocation5], 4
      %s42 = int_to_ptr.vmem [resolvable:$true] %s41
      %44 = dma.hbm_to_vmem [thread:$0]  %s40, 128, %s42, [#allocation6]
    $region25: #{tpu_custom_call.1} parent=1 // pred_fallthru
      _
    // Predicated region
    $region26: #{tpu_custom_call.1} parent=1 // pred_check
      _
    $region27: #{tpu_custom_call.1} parent=1 // pred_check_branch
      %46 = sbr.rel (0) target = $region29
    $region28: #{tpu_custom_call.1} parent=1 // pred_region
      %48 = vsyncadd [#allocation6], 0
      %s50 = sshll.u32 %s6, 4
      %s51 = int_to_ptr.hbm [resolvable:$true] %s50
      %s52 = sshll.u32 [#allocation7], 4
      %s53 = int_to_ptr.vmem [resolvable:$true] %s52
      %55 = dma.hbm_to_vmem [thread:$0]  %s51, 128, %s53, [#allocation6]
    $region29: #{tpu_custom_call.1} parent=1 // pred_fallthru
      _
    // Predicated region
    $region30: #{tpu_custom_call.1} parent=1 // pred_check
      _
    $region31: #{tpu_custom_call.1} parent=1 // pred_check_branch
      %57 = sbr.rel (0) target = $region33
    $region32: #{tpu_custom_call.1} parent=1 // pred_region
      %59 = dma.done [#allocation3], 128
    $region33: #{tpu_custom_call.1} parent=1 // pred_fallthru
      _
    // Predicated region
    $region34: #{tpu_custom_call.1} parent=1 // pred_check
      _
    $region35: #{tpu_custom_call.1} parent=1 // pred_check_branch
      %61 = sbr.rel (0) target = $region37
    $region36: #{tpu_custom_call.1} parent=1 // pred_region
      %63 = dma.done [#allocation6], 128
    $region37: #{tpu_custom_call.1} parent=1 // pred_fallthru
      _
    // Predicated region
    $region38: #{tpu_custom_call.1} parent=1 // pred_check
      _
    $region39: #{tpu_custom_call.1} parent=1 // pred_check_branch
      %65 = sbr.rel (0) target = $region41
    $region40: #{tpu_custom_call.1} parent=1 // pred_region
      %67 = dma.done [#allocation6], 128
    $region41: #{tpu_custom_call.1} parent=1 // pred_fallthru
      _
    %v68 = vld [vmem:[%s0] sm:$0xff]
    %v69 = vld [vmem:[%s1] sm:$0xff]
    %v70 = vld [vmem:[%s1 + $0x8] sm:$0xff]
    %vm71 = vcmask 64512
    %v73 = vsel %vm71, %v69, 0
    %v76 = vsel %vm71, %v70, 0
    %78 = vmatpush.msra.mxu0 0.0
    %79 = vmatpush.msra.mxu0 0.0
    %80 = vmatpush.msra.mxu0 0.0
    %81 = vmatpush.msra.mxu0 0.0
    %82 = vmatpush.msra.mxu0 0.0
    %83 = vmatpush.msra.mxu0 0.0
    %84 = vmatpush.msra.mxu0 0.0
    %85 = vmatpush.msra.mxu0 0.0
    %86 = vmatpush.msra.mxu0 0.0
    %87 = vmatpush.msra.mxu0 0.0
    %88 = vmatpush.msra.mxu0 0.0
    %89 = vmatpush.msra.mxu0 0.0
    %90 = vmatpush.msra.mxu0 0.0
    %91 = vmatpush.msra.mxu0 0.0
    %92 = vmatpush.msra.mxu0 0.0
    %93 = vmatpush.msra.mxu0 %v68
    %94 = vmatmul.f32.gmra.mxu0 %v73
    %v95 = vpop.f32.mrf.mxu0
    %v96 = vadd.f32 0.0, %v95
    %97 = vmatmul.f32.gmra.mxu0 %v76
    %v98 = vpop.f32.mrf.mxu0
    %v99 = vadd.f32 0.0, %v98
    %100 = vdwg.mxu0
    %v101 = vmul.f32 %v96, 0.63661975
    %v102 = vmul.f32 %v99, 0.63661975
    %v103 = vadd.f32 %v101, 0.5
    %v104 = vadd.f32 %v102, 0.5
    %v105 = vfloor.f32 %v103
    %v106 = vfloor.f32 %v104
    %v107 = vmul.f32 %v105, 1.5703125
    %v108 = vmul.f32 %v106, 1.5703125
    %v109 = vsub.f32 %v96, %v107
    %v110 = vsub.f32 %v99, %v108
    %v111 = vmul.f32 %v105, 0.0004837513
    %v112 = vmul.f32 %v106, 0.0004837513
    %v113 = vsub.f32 %v109, %v111
    %v114 = vsub.f32 %v110, %v112
    %v115 = vmul.f32 %v105, 7.54979e-08
    %v116 = vmul.f32 %v106, 7.54979e-08
    %v117 = vsub.f32 %v113, %v115
    %v118 = vsub.f32 %v114, %v116
    %v119 = vmul.f32 %v117, %v117
    %v120 = vmul.f32 %v118, %v118
    %v121 = vmul.f32 %v117, %v119
    %v122 = vmul.f32 %v118, %v120
    %v123 = vmul.f32 %v119, 2.7557319e-06
    %v124 = vmul.f32 %v120, 2.7557319e-06
    %v125 = vadd.f32 %v123, -0.0001984127
    %v126 = vadd.f32 %v124, -0.0001984127
    %v127 = vmul.f32 %v119, %v125
    %v128 = vmul.f32 %v120, %v126
    %v129 = vadd.f32 %v127, 0.008333334
    %v130 = vadd.f32 %v128, 0.008333334
    %v131 = vmul.f32 %v119, %v129
    %v132 = vmul.f32 %v120, %v130
    %v133 = vadd.f32 %v131, -0.16666667
    %v134 = vadd.f32 %v132, -0.16666667
    %v135 = vmul.f32 %v121, %v133
    %v136 = vmul.f32 %v122, %v134
    %v137 = vadd.f32 %v117, %v135
    %v138 = vadd.f32 %v118, %v136
    %v139 = vmul.f32 %v119, 2.4801588e-05
    %v140 = vmul.f32 %v120, 2.4801588e-05
    %v141 = vadd.f32 %v139, -0.0013888889
    %v142 = vadd.f32 %v140, -0.0013888889
    %v143 = vmul.f32 %v119, %v141
    %v144 = vmul.f32 %v120, %v142
    %v145 = vadd.f32 %v143, 0.041666668
    %v146 = vadd.f32 %v144, 0.041666668
    %v147 = vmul.f32 %v119, %v145
    %v148 = vmul.f32 %v120, %v146
    %v149 = vadd.f32 %v147, -0.5
    %v150 = vadd.f32 %v148, -0.5
    %v151 = vmul.f32 %v119, %v149
    %v152 = vmul.f32 %v120, %v150
    %v153 = vadd.f32 %v151, 1.0
    %v154 = vadd.f32 %v152, 1.0
    %v155 = vcvt.f32.s32.to.zero.pseudo %v105
    %v156 = vcvt.f32.s32.to.zero.pseudo %v106
    %v157 = vand.u32 %v155, 1
    %v158 = vand.u32 %v156, 1
    %vm159 = vcmp.eq.s32.totalorder %v157, 1
    %vm160 = vcmp.eq.s32.totalorder %v158, 1
    %v161 = vand.u32 %v155, 2
    %v162 = vand.u32 %v156, 2
    %vm163 = vcmp.eq.s32.totalorder %v161, 0
    %vm164 = vcmp.eq.s32.totalorder %v162, 0
    %v165 = vsel %vm163, 1.0, -1.0
    %v166 = vsel %vm164, 1.0, -1.0
    %v167 = vadd.s32 %v155, 1
    %v168 = vadd.s32 %v156, 1
    %v169 = vand.u32 %v167, 2
    %v170 = vand.u32 %v168, 2
    %vm171 = vcmp.eq.s32.totalorder %v169, 0
    %vm172 = vcmp.eq.s32.totalorder %v170, 0
    %v173 = vsel %vm171, 1.0, -1.0
    %v174 = vsel %vm172, 1.0, -1.0
    %v175 = vsel %vm159, %v153, %v137
    %v176 = vsel %vm160, %v154, %v138
    %v177 = vmul.f32 %v165, %v175
    %v178 = vmul.f32 %v166, %v176
    %v179 = vsel %vm159, %v137, %v153
    %v180 = vsel %vm160, %v138, %v154
    %v181 = vmul.f32 %v173, %v179
    %v182 = vmul.f32 %v174, %v180
    %v183 = vld [vmem:[%s2] sm:$0xff]
    %v184 = vld [vmem:[%s3] sm:$0xff]
    %v185 = vmul.f32 %v96, %v96
    %v186 = vmul.f32 %v99, %v99
    %vm187 = vcmask 130048
    %v189 = vsel %vm187, %v184, 0
    %191 = vmatpush.msra.mxu0 0.0
    %192 = vmatpush.msra.mxu0 0.0
    %193 = vmatpush.msra.mxu0 0.0
    %194 = vmatpush.msra.mxu0 0.0
    %195 = vmatpush.msra.mxu0 0.0
    %196 = vmatpush.msra.mxu0 0.0
    %197 = vmatpush.msra.mxu0 0.0
    %198 = vmatpush.msra.mxu0 0.0
    %199 = vmatpush.msra.mxu0 0.0
    %200 = vmatpush.msra.mxu0 0.0
    %201 = vmatpush.msra.mxu0 0.0
    %202 = vmatpush.msra.mxu0 0.0
    %203 = vmatpush.msra.mxu0 0.0
    %204 = vmatpush.msra.mxu0 0.0
    %205 = vmatpush.msra.mxu0 %v186
    %206 = vmatpush.msra.mxu0 %v185
    %207 = vmatmul.f32.gmra.mxu0 %v189
    %v208 = vpop.f32.mrf.mxu0
    %v209 = vadd.f32 0.0, %v208
    %210 = vdwg.mxu0
    %v212 = vsel %vm187, %v183, 0
    %214 = vmatpush.msra.mxu0 0.0
    %215 = vmatpush.msra.mxu0 0.0
    %216 = vmatpush.msra.mxu0 0.0
    %217 = vmatpush.msra.mxu0 0.0
    %218 = vmatpush.msra.mxu0 0.0
    %219 = vmatpush.msra.mxu0 0.0
    %220 = vmatpush.msra.mxu0 0.0
    %221 = vmatpush.msra.mxu0 0.0
    %222 = vmatpush.msra.mxu0 0.0
    %223 = vmatpush.msra.mxu0 0.0
    %224 = vmatpush.msra.mxu0 0.0
    %225 = vmatpush.msra.mxu0 0.0
    %226 = vmatpush.msra.mxu0 0.0
    %227 = vmatpush.msra.mxu0 0.0
    %228 = vmatpush.msra.mxu0 %v99
    %229 = vmatpush.msra.mxu0 %v96
    %230 = vmatmul.f32.gmra.mxu0 %v212
    %v231 = vpop.f32.mrf.mxu0
    %v232 = vadd.f32 %v209, %v231
    %233 = vdwg.mxu0
    %v234 = vld [vmem:[#allocation2] sm:$0xff]
    %v236 = vsel %vm187, %v234, 0
    %238 = vmatpush.msra.mxu0 0.0
    %239 = vmatpush.msra.mxu0 0.0
    %240 = vmatpush.msra.mxu0 0.0
    %241 = vmatpush.msra.mxu0 0.0
    %242 = vmatpush.msra.mxu0 0.0
    %243 = vmatpush.msra.mxu0 0.0
    %244 = vmatpush.msra.mxu0 0.0
    %245 = vmatpush.msra.mxu0 0.0
    %246 = vmatpush.msra.mxu0 0.0
    %247 = vmatpush.msra.mxu0 0.0
    %248 = vmatpush.msra.mxu0 0.0
    %249 = vmatpush.msra.mxu0 0.0
    %250 = vmatpush.msra.mxu0 0.0
    %251 = vmatpush.msra.mxu0 0.0
    %252 = vmatpush.msra.mxu0 %v178
    %253 = vmatpush.msra.mxu0 %v177
    %254 = vmatmul.f32.gmra.mxu0 %v236
    %v255 = vpop.f32.mrf.mxu0
    %v256 = vadd.f32 0.0, %v255
    %257 = vdwg.mxu0
    %v258 = vadd.f32 %v232, %v256
    %v259 = vld [vmem:[#allocation5] sm:$0xff]
    %v261 = vsel %vm187, %v259, 0
    %263 = vmatpush.msra.mxu0 0.0
    %264 = vmatpush.msra.mxu0 0.0
    %265 = vmatpush.msra.mxu0 0.0
    %266 = vmatpush.msra.mxu0 0.0
    %267 = vmatpush.msra.mxu0 0.0
    %268 = vmatpush.msra.mxu0 0.0
    %269 = vmatpush.msra.mxu0 0.0
    %270 = vmatpush.msra.mxu0 0.0
    %271 = vmatpush.msra.mxu0 0.0
    %272 = vmatpush.msra.mxu0 0.0
    %273 = vmatpush.msra.mxu0 0.0
    %274 = vmatpush.msra.mxu0 0.0
    %275 = vmatpush.msra.mxu0 0.0
    %276 = vmatpush.msra.mxu0 0.0
    %277 = vmatpush.msra.mxu0 %v182
    %278 = vmatpush.msra.mxu0 %v181
    %279 = vmatmul.f32.gmra.mxu0 %v261
    %v280 = vpop.f32.mrf.mxu0
    %v281 = vadd.f32 0.0, %v280
    %282 = vdwg.mxu0
    %v283 = vadd.f32 %v258, %v281
    %v284 = vmul.f32 %v283, 0.5
    %v285 = vtanh.pop %v284
    %v286 = vmul.f32 %v285, 0.5
    %v287 = vadd.f32 %v286, 0.5
    %v288 = vld [vmem:[#allocation7] sm:$0xff]
    %v290 = vsel %vm71, %v288, 0
    %292 = vmatpush.msra.mxu0 0.0
    %293 = vmatpush.msra.mxu0 0.0
    %294 = vmatpush.msra.mxu0 0.0
    %295 = vmatpush.msra.mxu0 0.0
    %296 = vmatpush.msra.mxu0 0.0
    %297 = vmatpush.msra.mxu0 0.0
    %298 = vmatpush.msra.mxu0 0.0
    %299 = vmatpush.msra.mxu0 0.0
    %300 = vmatpush.msra.mxu0 0.0
    %301 = vmatpush.msra.mxu0 0.0
    %302 = vmatpush.msra.mxu0 0.0
    %303 = vmatpush.msra.mxu0 0.0
    %304 = vmatpush.msra.mxu0 0.0
    %305 = vmatpush.msra.mxu0 0.0
    %306 = vmatpush.msra.mxu0 0.0
    %307 = vmatpush.msra.mxu0 %v287
    %308 = vmatmul.f32.gmra.mxu0 %v290
    %v309 = vpop.f32.mrf.mxu0
    %v310 = vadd.f32 0.0, %v309
    %311 = vdwg.mxu0
    %v312 = vmul.f32 %v310, 0.5
    %v313 = vtanh.pop %v312
    %v314 = vmul.f32 %v313, 0.5
    %v315 = vadd.f32 %v314, 0.5
    %316 = vst [vmem:[#allocation8] sm:$0x1] %v315
    // Predicated region
    $region42: #{tpu_custom_call.1} parent=1 // pred_check
      _
    $region43: #{tpu_custom_call.1} parent=1 // pred_check_branch
      %318 = sbr.rel (0) target = $region45
    $region44: #{tpu_custom_call.1} parent=1 // pred_region
      %320 = vsyncadd [#allocation4], 0
      %s322 = sshll.u32 [#allocation8], 4
      %s323 = int_to_ptr.vmem [resolvable:$true] %s322
      %s324 = sshll.u32 %s7, 4
      %s325 = int_to_ptr.hbm [resolvable:$true] %s324
      %327 = dma.vmem_to_hbm [thread:$0]  %s323, 16, %s325, [#allocation4]
    $region45: #{tpu_custom_call.1} parent=1 // pred_fallthru
      _
    // Predicated region
    $region46: #{tpu_custom_call.1} parent=1 // pred_check
      _
    $region47: #{tpu_custom_call.1} parent=1 // pred_check_branch
      %329 = sbr.rel (0) target = $region49
    $region48: #{tpu_custom_call.1} parent=1 // pred_region
      %331 = dma.done [#allocation4], 16
    $region49: #{tpu_custom_call.1} parent=1 // pred_fallthru
      _
    %332 = vsyncpa [#allocation3], 1
    %333 = vsyncpa [#allocation6], 1
    %334 = vsyncpa [#allocation4], 1

</llo_original>
